<compile_context>
chip_gen: v6e
topology: v6e:2x2x1
jax: 0.10.0
libtpu: 0.0.40
codegen_flags: <defaults>
</compile_context>

<pallas_src>
import jax
import jax.numpy as jnp
from jax.experimental import pallas as pl
from jax.experimental.pallas import tpu as pltpu

# Stand-in for ChemData().NAATOKENS (synthetic constant, ~ the real token count).
NAATOKENS = 80


def _round_up(x, m):
    return ((x + m - 1) // m) * m


def _masked_token_kernel(x_ref, w_ref, b_ref, o_ref):
    # x_ref: (1, tm, K)   activation tile
    # w_ref: (Cp, K)      weight prepacked output-major, resident across grid
    # b_ref: (Cp, 1)      bias column, f32
    # o_ref: (1, C, tm)   logits tile already in (channel, token) layout
    acc_t = jax.lax.dot_general(
        w_ref[...], x_ref[0],
        dimension_numbers=(((1,), (1,)), ((), ())),
        preferred_element_type=jnp.float32)           # (Cp, tm) straight off the MXU
    acc_t = acc_t + b_ref[...]                         # f32 epilogue on the VPU
    c = o_ref.shape[1]                                 # static C (== NAATOKENS)
    o_ref[0] = acc_t[:c, :].astype(o_ref.dtype)        # lane-dense store, drop pad rows


def _pick_tm(NL, B, max_tm):
    """Largest token tile (multiple of 128) that keeps padding minimal."""
    NL128 = _round_up(NL, 128)
    tm = 128
    for t in (128, 256, 512, 1024, 2048, 4096):
        if t > max_tm:
            break
        nl_pad = _round_up(NL, t)
        # Accept a bigger tile only if it adds no padding beyond the 128-roundup
        # (the minimum possible) or wastes <= ~5% HBM traffic.
        if nl_pad == NL128 or nl_pad <= int(1.05 * NL):
            tm = t
    # Keep >= 2 grid cells when the batch axis gives no parallelism (v7x: 2 TCs).
    if B == 1:
        while tm > 128 and _round_up(NL, tm) // tm < 2:
            tm //= 2
    return tm


def masked_token_network(x, weight, bias, *, max_tm=2048):
    """x: (B, N, L, n_feat); weight: (NAATOKENS, n_feat); bias: (NAATOKENS,).

    Returns logits of shape (B, NAATOKENS, N*L), matching the PyTorch module
    (proj(x).permute(0,3,1,2).reshape(B, -1, N*L)).

    max_tm: 2048 is safe on every generation (working set < 8 MiB even at
    K=256, well under v5e's 16 MiB scoped-VMEM default); raise to 4096 on v7x.
    """
    B, N, L, K = x.shape
    C = weight.shape[0]
    NL = N * L

    tm = _pick_tm(NL, B, max_tm)
    NL_pad = _round_up(NL, tm)

    x3d = x.reshape(B, NL, K)
    if NL_pad != NL:
        x3d = jnp.pad(x3d, ((0, 0), (0, NL_pad - NL), (0, 0)))

    # Zero-pad the channel axis to a 128 multiple so the MXU output tile is
    # lane-aligned; the pad rows are dropped before the store.
    Cp = _round_up(C, 128)
    w_pad = jnp.pad(weight.astype(x.dtype), ((0, Cp - C), (0, 0)))     # (Cp, K)
    b_pad = jnp.pad(bias.astype(jnp.float32).reshape(C, 1),
                    ((0, Cp - C), (0, 0)))                             # (Cp, 1)

    grid = (B, NL_pad // tm)
    elt = jnp.dtype(x.dtype).itemsize
    cost = pl.CostEstimate(
        flops=2 * B * NL_pad * K * Cp,
        transcendentals=0,
        bytes_accessed=(B * NL_pad * K + Cp * K) * elt + Cp * 4
        + B * C * NL_pad * elt,
    )

    out = pl.pallas_call(
        _masked_token_kernel,
        out_shape=jax.ShapeDtypeStruct((B, C, NL_pad), x.dtype),
        grid_spec=pltpu.PrefetchScalarGridSpec(
            num_scalar_prefetch=0,
            grid=grid,
            in_specs=[
                pl.BlockSpec((1, tm, K), lambda b, i: (b, i, 0)),   # activation tile
                pl.BlockSpec((Cp, K), lambda b, i: (0, 0)),         # resident weight
                pl.BlockSpec((Cp, 1), lambda b, i: (0, 0)),         # bias column
            ],
            out_specs=pl.BlockSpec((1, C, tm), lambda b, i: (b, 0, i)),
        ),
        compiler_params=pltpu.CompilerParams(
            dimension_semantics=("parallel", "parallel")),
        cost_estimate=cost,
    )(x3d, w_pad, b_pad)

    if NL_pad != NL:
        # TODO(synk): when NL % 128 != 0 this slice re-copies the logits once;
        # consumers that can handle the padded (B, C, NL_pad) buffer should
        # skip it (adaptive tm already keeps the pad <= 127 tokens).
        out = out[:, :, :NL]
    return out


if __name__ == "__main__":
    # Small shapes consistent with the module's forward: x is (B, N, L, n_feat).
    B, N, L, n_feat = 2, 4, 8, 32

    key = jax.random.PRNGKey(0)
    kx, kw, kb = jax.random.split(key, 3)
    x = jax.random.normal(kx, (B, N, L, n_feat), dtype=jnp.float32)

    # NOTE: the PyTorch module zero-inits proj.weight/bias (reset_parameter);
    # zeros would trivially produce an all-zero output, so we use deterministic
    # random parameters here to exercise the matmul + fused-transpose path.
    weight = jax.random.normal(kw, (NAATOKENS, n_feat), dtype=jnp.float32) * 0.02
    bias = jax.random.normal(kb, (NAATOKENS,), dtype=jnp.float32) * 0.01

    logits = jax.block_until_ready(masked_token_network(x, weight, bias))

    # Reference (plain JAX, mirrors the PyTorch forward exactly).
    ref = jnp.einsum("bnlk,ck->bnlc", x, weight) + bias
    ref = ref.transpose(0, 3, 1, 2).reshape(B, NAATOKENS, N * L)

    assert logits.shape == (B, NAATOKENS, N * L), logits.shape
    assert jnp.allclose(logits, ref, atol=1e-5, rtol=1e-5), "mismatch vs reference"

    # Second shape: NL is a multiple of 128 -> no padding and no post-call slice.
    B2, N2, L2 = 1, 2, 64
    x2 = jax.random.normal(kx, (B2, N2, L2, n_feat), dtype=jnp.float32)
    logits2 = jax.block_until_ready(masked_token_network(x2, weight, bias))
    ref2 = jnp.einsum("bnlk,ck->bnlc", x2, weight) + bias
    ref2 = ref2.transpose(0, 3, 1, 2).reshape(B2, NAATOKENS, N2 * L2)
    assert logits2.shape == (B2, NAATOKENS, N2 * L2), logits2.shape
    assert jnp.allclose(logits2, ref2, atol=1e-5, rtol=1e-5), "mismatch vs reference (no-pad path)"

    print("KERNEL_OK")
</pallas_src>

<mosaic_0001>
module attributes {stable_mosaic.version = 11 : i64} {
  func.func @_masked_token_kernel(%arg0: i32, %arg1: i32, %arg2: memref<1x128x32xf32, #tpu.memory_space<vmem>>, %arg3: memref<128x32xf32, #tpu.memory_space<vmem>>, %arg4: memref<128x1xf32, #tpu.memory_space<vmem>>, %arg5: memref<1x80x128xf32, #tpu.memory_space<vmem>>) attributes {dimension_semantics = [#tpu.dimension_semantics<parallel>, #tpu.dimension_semantics<parallel>], iteration_bounds = array<i64: 2, 1>, scalar_prefetch = 0 : i64, scratch_operands = 0 : i64, tpu.core_type = #tpu.core_type<tc>, window_params = [{transform_indices = @transform_0, window_bounds = array<i64: 1, 128, 32>}, {pipeline_mode = #tpu.pipeline_mode<synchronous>, transform_indices = @transform_1, window_bounds = array<i64: 128, 32>}, {pipeline_mode = #tpu.pipeline_mode<synchronous>, transform_indices = @transform_2, window_bounds = array<i64: 128, 1>}, {transform_indices = @transform_3, window_bounds = array<i64: 1, 80, 128>}]} {
    %c0 = arith.constant 0 : index
    %c0_0 = arith.constant 0 : index
    %0 = vector.load %arg3[%c0, %c0_0] : memref<128x32xf32, #tpu.memory_space<vmem>>, vector<128x32xf32>
    %c0_1 = arith.constant 0 : index
    %c0_2 = arith.constant 0 : index
    %c0_3 = arith.constant 0 : index
    %1 = vector.load %arg2[%c0_1, %c0_2, %c0_3] : memref<1x128x32xf32, #tpu.memory_space<vmem>>, vector<1x128x32xf32>
    %2 = vector.shape_cast %1 : vector<1x128x32xf32> to vector<128x32xf32>
    %cst = arith.constant dense<0.000000e+00> : vector<128x128xf32>
    %3 = tpu.matmul %0, %2, %cst {dimension_numbers = #tpu.dot_dimension_numbers<[1], [1], [0], [0], [0, 0, 1, 0], [], []>} : vector<128x32xf32>, vector<128x32xf32>, vector<128x128xf32> -> vector<128x128xf32>
    %c0_4 = arith.constant 0 : index
    %c0_5 = arith.constant 0 : index
    %4 = vector.load %arg4[%c0_4, %c0_5] : memref<128x1xf32, #tpu.memory_space<vmem>>, vector<128x1xf32>
    %5 = vector.broadcast %4 : vector<128x1xf32> to vector<128x128xf32>
    %6 = arith.addf %3, %5 : vector<128x128xf32>
    %7 = vector.extract_strided_slice %6 {offsets = [0, 0], sizes = [80, 128], strides = [1, 1]} : vector<128x128xf32> to vector<80x128xf32>
    %c0_6 = arith.constant 0 : index
    %c0_7 = arith.constant 0 : index
    %c0_8 = arith.constant 0 : index
    %8 = vector.load %arg5[%c0_6, %c0_7, %c0_8] : memref<1x80x128xf32, #tpu.memory_space<vmem>>, vector<1x80x128xf32>
    %9 = vector.shape_cast %8 : vector<1x80x128xf32> to vector<80x128xf32>
    %10 = vector.shape_cast %7 : vector<80x128xf32> to vector<1x80x128xf32>
    tpu.vector_store %arg5[%c0_6, %c0_7, %c0_8], %10 {strides = array<i32>} : memref<1x80x128xf32, #tpu.memory_space<vmem>>, vector<1x80x128xf32>,
    return
  }
  func.func @transform_0(%arg0: i32, %arg1: i32) -> (i32, i32, i32) {
    %c0_i32 = arith.constant 0 : i32
    %c0_i32_0 = arith.constant 0 : i32
    return %arg0, %arg1, %c0_i32 : i32, i32, i32
  }
  func.func @transform_1(%arg0: i32, %arg1: i32) -> (i32, i32) {
    %c0_i32 = arith.constant 0 : i32
    %c0_i32_0 = arith.constant 0 : i32
    %c0_i32_1 = arith.constant 0 : i32
    return %c0_i32, %c0_i32_0 : i32, i32
  }
  func.func @transform_2(%arg0: i32, %arg1: i32) -> (i32, i32) {
    %c0_i32 = arith.constant 0 : i32
    %c0_i32_0 = arith.constant 0 : i32
    %c0_i32_1 = arith.constant 0 : i32
    return %c0_i32, %c0_i32_0 : i32, i32
  }
  func.func @transform_3(%arg0: i32, %arg1: i32) -> (i32, i32, i32) {
    %c0_i32 = arith.constant 0 : i32
    %c0_i32_0 = arith.constant 0 : i32
    return %arg0, %c0_i32, %arg1 : i32, i32, i32
  }
}

</mosaic_0001>

<llo_original>
// kernel: tpu_custom_call.1
$region0: #{tpu_custom_call.1}
  #allocation0 [shape = 'u32[]', space=smem, size = 0x4, offset = 0x4, fixed_abs, tag = 'smem constant byte address 0x4 - core index']
  #allocation1 [shape = 'u32[144,128]{1,0:T(1,128)}', space=vmem, size = 0x12000, scoped, tag = 'internal scratch']
  %s0 = inlined_call_operand.vmem [shape: f32[2,128,32], index: 0, kind: input, shape index: {}]
  %s1 = inlined_call_operand.vmem [shape: f32[128,32], index: 1, kind: input, shape index: {}]
  %s2 = inlined_call_operand.vmem [shape: f32[128,1], index: 2, kind: input, shape index: {}]
  %s3 = inlined_call_operand.hbm [shape: f32[2,80,128], index: 3, kind: output, shape index: {}]
  %s4 = sld [smem:[#allocation0]]
  $region45: #{tpu_custom_call.1} parent=0
    _
  %s6 = ssub.s32 1, %s4
  %s7 = scalar_select 0, %s6, %s4
  $region1: #{tpu_custom_call.1} parent=0
    #allocation2 [shape = 'u8[81920]{0}', space=vmem, size = 0x14000, scoped, tag = 'output window, operand 0']
    #allocation3 [shape = 's32[2]{0}', space=sflag, size = 0x8, scoped, tag = 'scoped memory for tpu_custom_call.1']
    %8 = vsyncpa [#allocation3], 0
    %s9 = scalar_lea.sflag [#allocation3], 1
    %10 = vsyncpa %s9, 0
    loop: start=0, step=1, limit=4
    $region2: #{tpu_custom_call.1} parent=1 // loop_pre_header
      _
    $region3: #{tpu_custom_call.1} parent=1 // loop_header
      %s12 = sphi 0, %s16
      %p13 = scmp.ge.s32.totalorder %s12, 4
      %s19 = sphi 0, %s31
      %s20 = sphi 0, %s27
      %s21 = sphi 0, %s19
      %s22 = sphi 0, %s20
      %s23 = sphi 0, %s21
      %s24 = sphi 0, %s22
      %s36 = sphi 0, %s38
      %s39 = sphi 0, %s36
      %s40 = sphi 0, %s39
      %s56 = sphi 0, %s40
      %s60 = sphi 0, %s60
      %s62 = sphi 0, %s60
      %s63 = sphi 0, %s62
      %s77 = sphi 0, %s63
      %s81 = sphi 0, %s81
      %s83 = sphi 0, %s81
      %s84 = sphi 0, %s83
      %s98 = sphi 0, %s84
      %s106 = sphi 0, %s108
      %s109 = sphi 0, %s106
      %s110 = sphi 0, %s109
      %s126 = sphi 0, %s110
    $region4: #{tpu_custom_call.1} parent=1 // loop_header_branch
      %15 = sbr.rel (%p13) target = $region8
    $region5: #{tpu_custom_call.1} parent=1 // loop_body
      %s17 = ssub.s32 %s12, 1
      %s18 = ssub.s32 %s12, 2
      %s25 = sadd.s32 1, %s20
      %p26 = scmp.ge.s32.totalorder %s25, 1
      %s27 = scalar_select %p26, 0, %s25
      %s28 = sadd.s32 1, %s19
      %s29 = scalar_select %p26, %s28, %s19
      %p30 = scmp.ge.s32.totalorder %s29, 2
      %s31 = scalar_select %p30, 0, %s29
      %s32 = ssub.s32 %s19, %s31
      %s33 = ssub.s32 %s20, %s27
      %s34 = sor.u32 %s32, %s33
      %p35 = scmp.eq.s32.totalorder %s34, 0
      %s37 = sadd.s32 %s36, 1
      %s38 = scalar_select %p35, %s36, %s37
      %p41 = pneg %p35
      %p42 = scmp.eq.s32.totalorder %s12, 1
      %p43 = por %p41, %p42
      %p44 = scmp.ne.s32.totalorder %s36, %s39
      %p45 = scmp.eq.s32.totalorder %s12, 0
      %p46 = por %p44, %p45
      %p47 = scmp.ne.s32.totalorder %s36, %s39
      %p48 = scmp.eq.s32.totalorder %s17, 1
      %p49 = por %p47, %p48
      %p50 = scmp.ne.s32.totalorder %s39, %s40
      %p51 = scmp.eq.s32.totalorder %s17, 0
      %p52 = por %p50, %p51
      %p53 = scmp.ne.s32.totalorder %s39, %s40
      %p54 = scmp.eq.s32.totalorder %s18, 1
      %p55 = por %p53, %p54
      %p57 = scmp.ne.s32.totalorder %s40, %s56
      %p58 = scmp.eq.s32.totalorder %s18, 0
      %p59 = por %p57, %p58
      %s61 = sadd.s32 %s60, 1
      %p64 = scmp.eq.s32.totalorder %s12, 1
      %p65 = scmp.ne.s32.totalorder %s60, %s62
      %p66 = scmp.eq.s32.totalorder %s12, 0
      %p67 = por %p65, %p66
      %p68 = scmp.ne.s32.totalorder %s60, %s62
      %p69 = scmp.eq.s32.totalorder %s17, 1
      %p70 = por %p68, %p69
      %p71 = scmp.ne.s32.totalorder %s62, %s63
      %p72 = scmp.eq.s32.totalorder %s17, 0
      %p73 = por %p71, %p72
      %p74 = scmp.ne.s32.totalorder %s62, %s63
      %p75 = scmp.eq.s32.totalorder %s18, 1
      %p76 = por %p74, %p75
      %p78 = scmp.ne.s32.totalorder %s63, %s77
      %p79 = scmp.eq.s32.totalorder %s18, 0
      %p80 = por %p78, %p79
      %s82 = sadd.s32 %s81, 1
      %p85 = scmp.eq.s32.totalorder %s12, 1
      %p86 = scmp.ne.s32.totalorder %s81, %s83
      %p87 = scmp.eq.s32.totalorder %s12, 0
      %p88 = por %p86, %p87
      %p89 = scmp.ne.s32.totalorder %s81, %s83
      %p90 = scmp.eq.s32.totalorder %s17, 1
      %p91 = por %p89, %p90
      %p92 = scmp.ne.s32.totalorder %s83, %s84
      %p93 = scmp.eq.s32.totalorder %s17, 0
      %p94 = por %p92, %p93
      %p95 = scmp.ne.s32.totalorder %s83, %s84
      %p96 = scmp.eq.s32.totalorder %s18, 1
      %p97 = por %p95, %p96
      %p99 = scmp.ne.s32.totalorder %s84, %s98
      %p100 = scmp.eq.s32.totalorder %s18, 0
      %p101 = por %p99, %p100
      %s102 = ssub.s32 %s19, %s31
      %s103 = ssub.s32 %s20, %s27
      %s104 = sor.u32 %s102, %s103
      %p105 = scmp.eq.s32.totalorder %s104, 0
      %s107 = sadd.s32 %s106, 1
      %s108 = scalar_select %p105, %s106, %s107
      %p111 = pneg %p105
      %p112 = scmp.eq.s32.totalorder %s12, 1
      %p113 = por %p111, %p112
      %p114 = scmp.ne.s32.totalorder %s106, %s109
      %p115 = scmp.eq.s32.totalorder %s12, 0
      %p116 = por %p114, %p115
      %p117 = scmp.ne.s32.totalorder %s106, %s109
      %p118 = scmp.eq.s32.totalorder %s17, 1
      %p119 = por %p117, %p118
      %p120 = scmp.ne.s32.totalorder %s109, %s110
      %p121 = scmp.eq.s32.totalorder %s17, 0
      %p122 = por %p120, %p121
      %p123 = scmp.ne.s32.totalorder %s109, %s110
      %p124 = scmp.eq.s32.totalorder %s18, 1
      %p125 = por %p123, %p124
      %p127 = scmp.ne.s32.totalorder %s110, %s126
      %p128 = scmp.eq.s32.totalorder %s18, 0
      %p129 = por %p127, %p128
      %p130 = scmp.le.s32.totalorder 1, %s12
      %p131 = scmp.lt.s32.totalorder %s12, 3
      %p132 = pnand %p130, %p131
      %p133 = pneg %p132
      // Predicated region
      $region9: #{tpu_custom_call.1} parent=5 // pred_check
        _
      $region10: #{tpu_custom_call.1} parent=5 // pred_check_branch
        %135 = sbr.rel (%p132) target = $region12
      $region11: #{tpu_custom_call.1} parent=5 // pred_region
        %s136 = ssub.s32 %s12, 1
        // Predicated region
        $region13: #{tpu_custom_call.1} parent=11 // pred_check
          %p137 = pneg %p73
        $region14: #{tpu_custom_call.1} parent=11 // pred_check_branch
          %139 = sbr.rel (%p137) target = $region16
        $region15: #{tpu_custom_call.1} parent=11 // pred_region
          _
        $region16: #{tpu_custom_call.1} parent=11 // pred_fallthru
          _
        // Predicated region
        $region17: #{tpu_custom_call.1} parent=11 // pred_check
          %p140 = pneg %p94
        $region18: #{tpu_custom_call.1} parent=11 // pred_check_branch
          %142 = sbr.rel (%p140) target = $region20
        $region19: #{tpu_custom_call.1} parent=11 // pred_region
          _
        $region20: #{tpu_custom_call.1} parent=11 // pred_fallthru
          _
      $region12: #{tpu_custom_call.1} parent=5 // pred_fallthru
        _
      %p143 = scmp.lt.s32.totalorder %s12, 2
      // Predicated region
      $region21: #{tpu_custom_call.1} parent=5 // pred_check
        %p144 = pneg %p143
      $region22: #{tpu_custom_call.1} parent=5 // pred_check_branch
        %146 = sbr.rel (%p144) target = $region24
      $region23: #{tpu_custom_call.1} parent=5 // pred_region
        // Predicated region
        $region25: #{tpu_custom_call.1} parent=23 // pred_check
          %p147 = pneg %p46
        $region26: #{tpu_custom_call.1} parent=23 // pred_check_branch
          %149 = sbr.rel (%p147) target = $region28
        $region27: #{tpu_custom_call.1} parent=23 // pred_region
          %s150 = smul.u32 16, %s20
          %p151 = scmp.lt.s32.totalorder %s19, 1
          %s152 = scalar_select %p151, %s19, 1
          %p153 = scmp.lt.s32.totalorder %s150, 15
          %s154 = scalar_select %p153, %s150, 15
          %s155 = smul.addr %s152, 16
          %s156 = sadd.s32 %s154, %s155
          %s157 = smul.addr %s156, 8
          %s158 = scalar_lea.vmem %s0, %s157
          %s159 = smul.u32 16, %s20
        $region28: #{tpu_custom_call.1} parent=23 // pred_fallthru
          _
      $region24: #{tpu_custom_call.1} parent=5 // pred_fallthru
        _
      %p160 = scmp.le.s32.totalorder 1, %s12
      %p161 = scmp.lt.s32.totalorder %s12, 3
      %p162 = pnand %p160, %p161
      %p163 = pneg %p162
      // Predicated region
      $region29: #{tpu_custom_call.1} parent=5 // pred_check
        _
      $region30: #{tpu_custom_call.1} parent=5 // pred_check_branch
        %165 = sbr.rel (%p162) target = $region32
      $region31: #{tpu_custom_call.1} parent=5 // pred_region
        %s166 = ssub.s32 %s12, 1
        %s167 = smul.u32 16, %s22
        %p168 = scmp.lt.s32.totalorder %s21, 1
        %s169 = scalar_select %p168, %s21, 1
        %p170 = scmp.lt.s32.totalorder %s167, 15
        %s171 = scalar_select %p170, %s167, 15
        %s172 = smul.addr %s169, 16
        %s173 = sadd.s32 %s171, %s172
        %s174 = smul.addr %s173, 8
        %s175 = scalar_lea.vmem %s0, %s174
        %p176 = pneg %p52
        %p177 = pneg %p49
        %p178 = pneg %p73
        %p179 = pneg %p70
        %p180 = pneg %p94
        %p181 = pneg %p91
        %p182 = pneg %p122
        %p183 = pneg %p119
        %s184 = sand.u32 %s109, 1
        %s185 = scalar_lea.sflag [#allocation3], %s184
        %s186 = sand.u32 %s109, 1
        %s187 = smul.addr %s186, 80
        %s188 = scalar_lea.vmem [#allocation2], %s187
        %s189 = smul.u32 16, %s22
        %p190 = scmp.lt.s32.totalorder %s21, 1
        %s191 = scalar_select %p190, %s21, 1
        %p192 = scmp.lt.s32.totalorder %s189, 15
        %s193 = scalar_select %p192, %s189, 15
        %s194 = smul.addr %s191, 16
        %s195 = sadd.s32 %s193, %s194
        %s196 = smul.addr %s195, 8
        %s197 = scalar_lea.vmem %s0, %s196
        %s198 = smul.u32 16, %s22
        %v199 = vld [vmem:[%s1] sm:$0xff]
        %v200 = vld [vmem:[%s1 + $0x8] sm:$0xff]
        %v201 = vld [vmem:[%s1 + $0x10] sm:$0xff]
        %v202 = vld [vmem:[%s1 + $0x18] sm:$0xff]
        %v203 = vld [vmem:[%s1 + $0x20] sm:$0xff]
        %v204 = vld [vmem:[%s1 + $0x28] sm:$0xff]
        %v205 = vld [vmem:[%s1 + $0x30] sm:$0xff]
        %v206 = vld [vmem:[%s1 + $0x38] sm:$0xff]
        %v207 = vld [vmem:[%s1 + $0x40] sm:$0xff]
        %v208 = vld [vmem:[%s1 + $0x48] sm:$0xff]
        %v209 = vld [vmem:[%s1 + $0x50] sm:$0xff]
        %v210 = vld [vmem:[%s1 + $0x58] sm:$0xff]
        %v211 = vld [vmem:[%s1 + $0x60] sm:$0xff]
        %v212 = vld [vmem:[%s1 + $0x68] sm:$0xff]
        %v213 = vld [vmem:[%s1 + $0x70] sm:$0xff]
        %v214 = vld [vmem:[%s1 + $0x78] sm:$0xff]
        %v215 = vld [vmem:[%s197] sm:$0xff]
        %v216 = vld [vmem:[%s197 + $0x8] sm:$0xff]
        %v217 = vld [vmem:[%s197 + $0x10] sm:$0xff]
        %v218 = vld [vmem:[%s197 + $0x18] sm:$0xff]
        %v219 = vld [vmem:[%s197 + $0x20] sm:$0xff]
        %v220 = vld [vmem:[%s197 + $0x28] sm:$0xff]
        %v221 = vld [vmem:[%s197 + $0x30] sm:$0xff]
        %v222 = vld [vmem:[%s197 + $0x38] sm:$0xff]
        %v223 = vld [vmem:[%s197 + $0x40] sm:$0xff]
        %v224 = vld [vmem:[%s197 + $0x48] sm:$0xff]
        %v225 = vld [vmem:[%s197 + $0x50] sm:$0xff]
        %v226 = vld [vmem:[%s197 + $0x58] sm:$0xff]
        %v227 = vld [vmem:[%s197 + $0x60] sm:$0xff]
        %v228 = vld [vmem:[%s197 + $0x68] sm:$0xff]
        %v229 = vld [vmem:[%s197 + $0x70] sm:$0xff]
        %v230 = vld [vmem:[%s197 + $0x78] sm:$0xff]
        %v231 = vld [vmem:[%s2] sm:$0xff]
        %v232 = vld [vmem:[%s2 + $0x8] sm:$0xff]
        %v233 = vld [vmem:[%s2 + $0x10] sm:$0xff]
        %v234 = vld [vmem:[%s2 + $0x18] sm:$0xff]
        %v235 = vld [vmem:[%s2 + $0x20] sm:$0xff]
        %v236 = vld [vmem:[%s2 + $0x28] sm:$0xff]
        %v237 = vld [vmem:[%s2 + $0x30] sm:$0xff]
        %v238 = vld [vmem:[%s2 + $0x38] sm:$0xff]
        %v239 = vld [vmem:[%s2 + $0x40] sm:$0xff]
        %v240 = vld [vmem:[%s2 + $0x48] sm:$0xff]
        %v241 = vld [vmem:[%s2 + $0x50] sm:$0xff]
        %v242 = vld [vmem:[%s2 + $0x58] sm:$0xff]
        %v243 = vld [vmem:[%s2 + $0x60] sm:$0xff]
        %v244 = vld [vmem:[%s2 + $0x68] sm:$0xff]
        %v245 = vld [vmem:[%s2 + $0x70] sm:$0xff]
        %v246 = vld [vmem:[%s2 + $0x78] sm:$0xff]
        %248 = vset.pattern.permute.xlu0 0
        %249 = vperm.xlu0 %248, %v231
        %v250 = vpop.permute.xlu0 %249
        %253 = vset.pattern.permute.xlu0 0
        %254 = vperm.xlu0 %253, %v232
        %v255 = vpop.permute.xlu0 %254
        %258 = vset.pattern.permute.xlu0 0
        %259 = vperm.xlu0 %258, %v233
        %v260 = vpop.permute.xlu0 %259
        %263 = vset.pattern.permute.xlu0 0
        %264 = vperm.xlu0 %263, %v234
        %v265 = vpop.permute.xlu0 %264
        %268 = vset.pattern.permute.xlu0 0
        %269 = vperm.xlu0 %268, %v235
        %v270 = vpop.permute.xlu0 %269
        %273 = vset.pattern.permute.xlu0 0
        %274 = vperm.xlu0 %273, %v236
        %v275 = vpop.permute.xlu0 %274
        %278 = vset.pattern.permute.xlu0 0
        %279 = vperm.xlu0 %278, %v237
        %v280 = vpop.permute.xlu0 %279
        %283 = vset.pattern.permute.xlu0 0
        %284 = vperm.xlu0 %283, %v238
        %v285 = vpop.permute.xlu0 %284
        %288 = vset.pattern.permute.xlu0 0
        %289 = vperm.xlu0 %288, %v239
        %v290 = vpop.permute.xlu0 %289
        %293 = vset.pattern.permute.xlu0 0
        %294 = vperm.xlu0 %293, %v240
        %v295 = vpop.permute.xlu0 %294
        %298 = vset.pattern.permute.xlu0 0
        %299 = vperm.xlu0 %298, %v241
        %v300 = vpop.permute.xlu0 %299
        %302 = vset.pattern.permute.xlu0 0
        %303 = vperm.xlu0 %302, %v242
        %v304 = vpop.permute.xlu0 %303
        %306 = vset.pattern.permute.xlu0 0
        %307 = vperm.xlu0 %306, %v243
        %v308 = vpop.permute.xlu0 %307
        %310 = vset.pattern.permute.xlu0 0
        %311 = vperm.xlu0 %310, %v244
        %v312 = vpop.permute.xlu0 %311
        %314 = vset.pattern.permute.xlu0 0
        %315 = vperm.xlu0 %314, %v245
        %v316 = vpop.permute.xlu0 %315
        %318 = vset.pattern.permute.xlu0 0
        %319 = vperm.xlu0 %318, %v246
        %v320 = vpop.permute.xlu0 %319
        %vm321 = vcmask 261120
        %v323 = vsel %vm321, %v199, 0
        %v326 = vsel %vm321, %v200, 0
        %v329 = vsel %vm321, %v201, 0
        %v332 = vsel %vm321, %v202, 0
        %v335 = vsel %vm321, %v203, 0
        %v338 = vsel %vm321, %v204, 0
        %v341 = vsel %vm321, %v205, 0
        %v344 = vsel %vm321, %v206, 0
        %v347 = vsel %vm321, %v207, 0
        %v350 = vsel %vm321, %v208, 0
        %v353 = vsel %vm321, %v209, 0
        %v356 = vsel %vm321, %v210, 0
        %v359 = vsel %vm321, %v211, 0
        %v362 = vsel %vm321, %v212, 0
        %v365 = vsel %vm321, %v213, 0
        %v368 = vsel %vm321, %v214, 0
        %v371 = vsel %vm321, %v215, 0
        %v374 = vsel %vm321, %v216, 0
        %v377 = vsel %vm321, %v217, 0
        %v380 = vsel %vm321, %v218, 0
        %v383 = vsel %vm321, %v219, 0
        %v386 = vsel %vm321, %v220, 0
        %v389 = vsel %vm321, %v221, 0
        %v392 = vsel %vm321, %v222, 0
        %v395 = vsel %vm321, %v223, 0
        %v398 = vsel %vm321, %v224, 0
        %v401 = vsel %vm321, %v225, 0
        %v404 = vsel %vm321, %v226, 0
        %v407 = vsel %vm321, %v227, 0
        %v410 = vsel %vm321, %v228, 0
        %v413 = vsel %vm321, %v229, 0
        %v416 = vsel %vm321, %v230, 0
        %418 = vmatprep.subr.mxu0 0.0
        %419 = vmatpush1.xpose.msra.mxu0 %v416
        %420 = vmatprep.subr.mxu0 0.0
        %421 = vmatpush1.xpose.msra.mxu0 %v413
        %422 = vmatprep.subr.mxu0 0.0
        %423 = vmatpush1.xpose.msra.mxu0 %v410
        %424 = vmatprep.subr.mxu0 0.0
        %425 = vmatpush1.xpose.msra.mxu0 %v407
        %426 = vmatprep.subr.mxu0 0.0
        %427 = vmatpush1.xpose.msra.mxu0 %v404
        %428 = vmatprep.subr.mxu0 0.0
        %429 = vmatpush1.xpose.msra.mxu0 %v401
        %430 = vmatprep.subr.mxu0 0.0
        %431 = vmatpush1.xpose.msra.mxu0 %v398
        %432 = vmatprep.subr.mxu0 0.0
        %433 = vmatpush1.xpose.msra.mxu0 %v395
        %434 = vmatprep.subr.mxu0 0.0
        %435 = vmatpush1.xpose.msra.mxu0 %v392
        %436 = vmatprep.subr.mxu0 0.0
        %437 = vmatpush1.xpose.msra.mxu0 %v389
        %438 = vmatprep.subr.mxu0 0.0
        %439 = vmatpush1.xpose.msra.mxu0 %v386
        %440 = vmatprep.subr.mxu0 0.0
        %441 = vmatpush1.xpose.msra.mxu0 %v383
        %442 = vmatprep.subr.mxu0 0.0
        %443 = vmatpush1.xpose.msra.mxu0 %v380
        %444 = vmatprep.subr.mxu0 0.0
        %445 = vmatpush1.xpose.msra.mxu0 %v377
        %446 = vmatprep.subr.mxu0 0.0
        %447 = vmatpush1.xpose.msra.mxu0 %v374
        %448 = vmatprep.subr.mxu0 0.0
        %449 = vmatpush1.xpose.msra.mxu0 %v371
        %450 = vmatprep.subr.mxu0 0.0
        %451 = vmatpush2.xpose.msra.mxu0 0.0
        %452 = vmatprep.subr.mxu0 0.0
        %453 = vmatpush2.xpose.msra.mxu0 0.0
        %454 = vmatprep.subr.mxu0 0.0
        %455 = vmatpush2.xpose.msra.mxu0 0.0
        %456 = vmatprep.subr.mxu0 0.0
        %457 = vmatpush2.xpose.msra.mxu0 0.0
        %458 = vmatprep.subr.mxu0 0.0
        %459 = vmatpush2.xpose.msra.mxu0 0.0
        %460 = vmatprep.subr.mxu0 0.0
        %461 = vmatpush2.xpose.msra.mxu0 0.0
        %462 = vmatprep.subr.mxu0 0.0
        %463 = vmatpush2.xpose.msra.mxu0 0.0
        %464 = vmatprep.subr.mxu0 0.0
        %465 = vmatpush2.xpose.msra.mxu0 0.0
        %466 = vmatprep.subr.mxu0 0.0
        %467 = vmatpush2.xpose.msra.mxu0 0.0
        %468 = vmatprep.subr.mxu0 0.0
        %469 = vmatpush2.xpose.msra.mxu0 0.0
        %470 = vmatprep.subr.mxu0 0.0
        %471 = vmatpush2.xpose.msra.mxu0 0.0
        %472 = vmatprep.subr.mxu0 0.0
        %473 = vmatpush2.xpose.msra.mxu0 0.0
        %474 = vmatprep.subr.mxu0 0.0
        %475 = vmatpush2.xpose.msra.mxu0 0.0
        %476 = vmatprep.subr.mxu0 0.0
        %477 = vmatpush2.xpose.msra.mxu0 0.0
        %478 = vmatprep.subr.mxu0 0.0
        %479 = vmatpush2.xpose.msra.mxu0 0.0
        %480 = vmatprep.subr.mxu0 0.0
        %481 = vmatpush2.xpose.msra.mxu0 0.0
        %482 = vmatprep.mubr.f32.mxu0 0.0
        %483 = vmatmul.mubr.f32.gmra.mxu0 %v323
        %v484 = vpop.f32.mrf.mxu0
        %v485 = vadd.f32 %v250, %v484
        %v486 = vpop.f32.mrf.mxu0
        %487 = vmatprep.mubr.f32.mxu0 0.0
        %488 = vmatmul.mubr.f32.gmra.mxu0 %v326
        %v489 = vpop.f32.mrf.mxu0
        %v490 = vadd.f32 %v255, %v489
        %v491 = vpop.f32.mrf.mxu0
        %492 = vmatprep.mubr.f32.mxu0 0.0
        %493 = vmatmul.mubr.f32.gmra.mxu0 %v329
        %v494 = vpop.f32.mrf.mxu0
        %v495 = vadd.f32 %v260, %v494
        %v496 = vpop.f32.mrf.mxu0
        %497 = vmatprep.mubr.f32.mxu0 0.0
        %498 = vmatmul.mubr.f32.gmra.mxu0 %v332
        %v499 = vpop.f32.mrf.mxu0
        %v500 = vadd.f32 %v265, %v499
        %v501 = vpop.f32.mrf.mxu0
        %502 = vmatprep.mubr.f32.mxu0 0.0
        %503 = vmatmul.mubr.f32.gmra.mxu0 %v335
        %v504 = vpop.f32.mrf.mxu0
        %v505 = vadd.f32 %v270, %v504
        %v506 = vpop.f32.mrf.mxu0
        %507 = vmatprep.mubr.f32.mxu0 0.0
        %508 = vmatmul.mubr.f32.gmra.mxu0 %v338
        %v509 = vpop.f32.mrf.mxu0
        %v510 = vadd.f32 %v275, %v509
        %v511 = vpop.f32.mrf.mxu0
        %512 = vmatprep.mubr.f32.mxu0 0.0
        %513 = vmatmul.mubr.f32.gmra.mxu0 %v341
        %v514 = vpop.f32.mrf.mxu0
        %v515 = vadd.f32 %v280, %v514
        %v516 = vpop.f32.mrf.mxu0
        %517 = vmatprep.mubr.f32.mxu0 0.0
        %518 = vmatmul.mubr.f32.gmra.mxu0 %v344
        %v519 = vpop.f32.mrf.mxu0
        %v520 = vadd.f32 %v285, %v519
        %v521 = vpop.f32.mrf.mxu0
        %522 = vmatprep.mubr.f32.mxu0 0.0
        %523 = vmatmul.mubr.f32.gmra.mxu0 %v347
        %v524 = vpop.f32.mrf.mxu0
        %v525 = vadd.f32 %v290, %v524
        %v526 = vpop.f32.mrf.mxu0
        %527 = vmatprep.mubr.f32.mxu0 0.0
        %528 = vmatmul.mubr.f32.gmra.mxu0 %v350
        %v529 = vpop.f32.mrf.mxu0
        %v530 = vadd.f32 %v295, %v529
        %v531 = vpop.f32.mrf.mxu0
        %532 = vmatprep.mubr.f32.mxu0 0.0
        %533 = vmatmul.mubr.f32.gmra.mxu0 %v353
        %v534 = vpop.f32.mrf.mxu0
        %v535 = vpop.f32.mrf.mxu0
        %536 = vmatprep.mubr.f32.mxu0 0.0
        %537 = vmatmul.mubr.f32.gmra.mxu0 %v356
        %v538 = vpop.f32.mrf.mxu0
        %v539 = vpop.f32.mrf.mxu0
        %540 = vmatprep.mubr.f32.mxu0 0.0
        %541 = vmatmul.mubr.f32.gmra.mxu0 %v359
        %v542 = vpop.f32.mrf.mxu0
        %v543 = vpop.f32.mrf.mxu0
        %544 = vmatprep.mubr.f32.mxu0 0.0
        %545 = vmatmul.mubr.f32.gmra.mxu0 %v362
        %v546 = vpop.f32.mrf.mxu0
        %v547 = vpop.f32.mrf.mxu0
        %548 = vmatprep.mubr.f32.mxu0 0.0
        %549 = vmatmul.mubr.f32.gmra.mxu0 %v365
        %v550 = vpop.f32.mrf.mxu0
        %v551 = vpop.f32.mrf.mxu0
        %552 = vmatprep.mubr.f32.mxu0 0.0
        %553 = vmatmul.mubr.f32.gmra.mxu0 %v368
        %v554 = vpop.f32.mrf.mxu0
        %v555 = vpop.f32.mrf.mxu0
        %556 = vdwg.mxu0
        %557 = vst [vmem:[%s188] sm:$0xff] %v485
        %558 = vst [vmem:[%s188 + $0x8] sm:$0xff] %v490
        %559 = vst [vmem:[%s188 + $0x10] sm:$0xff] %v495
        %560 = vst [vmem:[%s188 + $0x18] sm:$0xff] %v500
        %561 = vst [vmem:[%s188 + $0x20] sm:$0xff] %v505
        %562 = vst [vmem:[%s188 + $0x28] sm:$0xff] %v510
        %563 = vst [vmem:[%s188 + $0x30] sm:$0xff] %v515
        %564 = vst [vmem:[%s188 + $0x38] sm:$0xff] %v520
        %565 = vst [vmem:[%s188 + $0x40] sm:$0xff] %v525
        %566 = vst [vmem:[%s188 + $0x48] sm:$0xff] %v530
        %s567 = sand.u32 %s109, 1
        %s568 = scalar_lea.sflag [#allocation3], %s567
        %s569 = sand.u32 %s109, 1
        %s570 = smul.addr %s569, 80
        %s571 = scalar_lea.vmem [#allocation2], %s570
        // Predicated region
        $region33: #{tpu_custom_call.1} parent=31 // pred_check
          %p572 = pneg %p119
        $region34: #{tpu_custom_call.1} parent=31 // pred_check_branch
          %574 = sbr.rel (%p572) target = $region36
        $region35: #{tpu_custom_call.1} parent=31 // pred_region
          %s576 = ssub.s32 1280, 1280
          %577 = vsyncadd %s568, %s576
          %s578 = smul.addr %s21, 10
          %s579 = sadd.s32 %s22, %s578
          %s580 = smul.addr %s579, 128
          %s581 = scalar_lea.hbm %s3, %s580
          %s582 = sshll.u32 %s571, 4
          %s583 = int_to_ptr.vmem [resolvable:$true] %s582
          %588 = dma.vmem_to_hbm [thread:$0]  %s583, 1280, %s581, %s568, 128, 128, 8
        $region36: #{tpu_custom_call.1} parent=31 // pred_fallthru
          _
      $region32: #{tpu_custom_call.1} parent=5 // pred_fallthru
        _
      %p589 = scmp.le.s32.totalorder 2, %s12
      // Predicated region
      $region37: #{tpu_custom_call.1} parent=5 // pred_check
        %p590 = pneg %p589
      $region38: #{tpu_custom_call.1} parent=5 // pred_check_branch
        %592 = sbr.rel (%p590) target = $region40
      $region39: #{tpu_custom_call.1} parent=5 // pred_region
        %s593 = ssub.s32 %s12, 2
        // Predicated region
        $region41: #{tpu_custom_call.1} parent=39 // pred_check
          %p594 = pneg %p125
        $region42: #{tpu_custom_call.1} parent=39 // pred_check_branch
          %596 = sbr.rel (%p594) target = $region44
        $region43: #{tpu_custom_call.1} parent=39 // pred_region
          %s597 = sand.u32 %s110, 1
          %s598 = scalar_lea.sflag [#allocation3], %s597
          %s599 = sand.u32 %s110, 1
          %s600 = smul.addr %s599, 80
          %s601 = scalar_lea.vmem [#allocation2], %s600
          %602 = dma.done %s598, 1280
        $region44: #{tpu_custom_call.1} parent=39 // pred_fallthru
          _
      $region40: #{tpu_custom_call.1} parent=5 // pred_fallthru
        _
    $region6: #{tpu_custom_call.1} parent=1 // loop_footer
      %s16 = sadd.s32 1, %s12
    $region7: #{tpu_custom_call.1} parent=1 // loop_footer_branch
      %11 = sbr.rel target = $region3
    $region8: #{tpu_custom_call.1} parent=1 // loop_exit
      _
    %603 = vsyncpa [#allocation3], 1
    %s604 = scalar_lea.sflag [#allocation3], 1
    %605 = vsyncpa %s604, 1

</llo_original>
